<compile_context>
chip_gen: v5e
topology: v5e:2x2
jax: 0.10.0
libtpu: 0.0.40
codegen_flags: <defaults>
</compile_context>

<pallas_src>
import functools

import jax
import jax.numpy as jnp
from jax.experimental import pallas as pl
from jax.experimental.pallas import tpu as pltpu


def _cdiv(a, b):
    return (a + b - 1) // b


def _round_up(a, b):
    return _cdiv(a, b) * b


def _listnet_kernel(*refs, inv_temp, g, n, valid_rows, has_bias, needs_mask):
    """One (TB, g*n) tile of packed rows -> per-tile KL sum into SMEM."""
    if has_bias:
        scores_ref, labels_ref, bias_ref, out_ref = refs
    else:
        scores_ref, labels_ref, out_ref = refs
        bias_ref = None

    tb, w = scores_ref.shape  # static; w == g * n

    s = scores_ref[...].astype(jnp.float32)
    if has_bias:
        s = s + bias_ref[...].astype(jnp.float32)
    if inv_temp != 1.0:
        s = s * inv_temp
    t = labels_ref[...].astype(jnp.float32)

    if needs_mask:
        # Ragged last tile: rows beyond the true (packed) row count contain
        # undefined data.  Neutralize them BEFORE any row reduction so garbage
        # cannot become inf/NaN; zeroed labels make their KL contribution 0.
        row = (jax.lax.broadcasted_iota(jnp.int32, (tb, w), 0)
               + pl.program_id(0) * tb)
        valid = row < valid_rows
        s = jnp.where(valid, s, 0.0)
        t = jnp.where(valid, t, 0.0)

    # g logical rows of n items are packed along the lane axis.  Heavy
    # elementwise work stays lane-dense on the full (tb, w) tile; only the
    # small per-row reductions are segmented (static unrolled loop over g).
    segs = [slice(k * n, (k + 1) * n) for k in range(g)]

    m_parts, inv_parts, tsum_parts = [], [], []
    for sl in segs:
        m_k = jnp.max(s[:, sl], axis=-1, keepdims=True)          # [tb, 1]
        rs_k = jnp.sum(t[:, sl], axis=-1, keepdims=True)         # [tb, 1]
        inv_k = 1.0 / jnp.maximum(rs_k, 1e-8)
        m_parts.append(m_k)
        inv_parts.append(inv_k)
        tsum_parts.append(rs_k * inv_k)          # sum(target) in segment (0/1)

    def _bcast(parts):
        if g == 1:
            return parts[0]                      # [tb,1] broadcasts naturally
        return jnp.concatenate(
            [jnp.broadcast_to(p, (tb, n)) for p in parts], axis=-1)

    z = s - _bcast(m_parts)                      # [tb, w]
    e = jnp.exp(z)                               # dense EUP
    target = t * _bcast(inv_parts)               # dense VPU

    # Per-row correction term: lse * sum(target).
    row_terms = []
    for sl, ts in zip(segs, tsum_parts):
        se_k = jnp.sum(e[:, sl], axis=-1, keepdims=True)         # [tb, 1]
        row_terms.append(jnp.log(se_k) * ts)
    row_term = row_terms[0] if g == 1 else jnp.concatenate(row_terms, axis=-1)

    # Elementwise KL with 0*log0 -> 0:
    #   sum target*(log target - log_pred)
    #     = sum target*(log target - z) + sum_rows lse * sum(target)
    mask = target > 0.0
    log_t = jnp.log(jnp.where(mask, target, 1.0))
    elem = jnp.where(mask, target * (log_t - z), 0.0)

    out_ref[0, 0] = jnp.sum(elem) + jnp.sum(row_term)


def _pick_packing(batch, num_items):
    """g logical rows per packed lane-row (zero-copy row-major reshape)."""
    if num_items >= 128:
        return 1
    g_max = max(1, 128 // num_items)
    for g in range(min(g_max, batch), 0, -1):
        if batch % g == 0:
            return g
    return 1


def _pick_tiling(rows, width, itemsizes):
    """Balanced, VMEM-budgeted row tiling of the packed [rows, width] arrays."""
    # Per packed row: double-buffered native-dtype input streams plus roughly
    # 8 live f32 tile-sized temporaries in the kernel body.
    row_bytes = sum(2 * width * sz for sz in itemsizes) + 8 * width * 4
    budget = 8 * 1024 * 1024          # safe under v5e's 16 MiB scoped default
    tb_max = max(8, min(1024, (budget // max(row_bytes, 1)) // 8 * 8))

    num_tiles = _cdiv(rows, tb_max)
    if num_tiles == 1 and rows >= 16:
        num_tiles = 2                 # keep both v7x TensorCores busy
    tb = min(rows, _round_up(_cdiv(rows, num_tiles), 8))
    num_tiles = _cdiv(rows, tb)
    return tb, num_tiles, row_bytes * tb


def listnet_ranking_loss(scores, relevance_labels, position_bias=None,
                         temperature: float = 1.0):
    """Pallas implementation of ListNetRankingLoss.forward (returns scalar)."""
    assert scores.ndim == 2 and scores.shape == relevance_labels.shape
    if position_bias is not None:
        assert position_bias.shape == scores.shape
    batch_size, num_items = scores.shape
    has_bias = position_bias is not None

    # Lane packing for small num_items (zero-copy reshape, row-major).
    g = _pick_packing(batch_size, num_items)
    rows = batch_size // g
    width = g * num_items

    def _pack(x):                     # native dtype; no float32 cast here
        return x.reshape(rows, width) if g > 1 else x

    inputs = [_pack(scores), _pack(relevance_labels)]
    if has_bias:
        inputs.append(_pack(position_bias))

    tb, num_tiles, est_vmem = _pick_tiling(
        rows, width, [x.dtype.itemsize for x in inputs])
    needs_mask = (num_tiles * tb != rows)

    kernel = functools.partial(
        _listnet_kernel,
        inv_temp=1.0 / float(temperature),
        g=g, n=num_items, valid_rows=rows,
        has_bias=has_bias, needs_mask=needs_mask)

    row_spec = pl.BlockSpec((tb, width), lambda i: (i, 0))
    out_spec = pl.BlockSpec((1, 1), lambda i: (i, 0), memory_space=pltpu.SMEM)

    cp = dict(dimension_semantics=("parallel",))
    if est_vmem > (7 << 20):
        # Extremely wide rows: raise the scoped-VMEM limit to cover the tile
        # plus temporaries, staying well under v7x's 64 MiB physical VMEM.
        cp["vmem_limit_bytes"] = int(min(32 << 20, max(16 << 20, 2 * est_vmem)))
        # TODO(synk): if even an 8-row tile exceeds ~32 MiB (num_items in the
        # hundreds of thousands), tile the item axis as a second grid dim.

    partial_sums = pl.pallas_call(
        kernel,
        out_shape=jax.ShapeDtypeStruct((num_tiles, 1), jnp.float32),
        grid=(num_tiles,),
        in_specs=[row_spec] * len(inputs),
        out_specs=out_spec,
        compiler_params=pltpu.CompilerParams(**cp),
    )(*inputs)

    # 'batchmean' reduction: sum of all per-tile sums / original batch size.
    return jnp.sum(partial_sums) * (1.0 / batch_size)


def _reference_loss(scores, labels, bias, temperature):
    """Pure-JAX reference mirroring the torch semantics (computed in f32)."""
    s = scores.astype(jnp.float32)
    if bias is not None:
        s = s + bias.astype(jnp.float32)
    s = s / temperature
    log_pred = jax.nn.log_softmax(s, axis=-1)
    labels = labels.astype(jnp.float32)
    rel_sum = jnp.maximum(labels.sum(axis=-1, keepdims=True), 1e-8)
    target = labels / rel_sum
    kl = jnp.where(
        target > 0,
        target * (jnp.log(jnp.where(target > 0, target, 1.0)) - log_pred),
        0.0,
    )
    return jnp.sum(kl) / scores.shape[0]


if __name__ == "__main__":
    key = jax.random.PRNGKey(0)
    keys = jax.random.split(key, 8)

    # Case 1: module-spec shapes with position bias (lane-packed: g=2, w=16).
    batch, num_items = 2, 8
    temperature = 0.7
    scores = jax.random.normal(keys[0], (batch, num_items), dtype=jnp.float32)
    labels = (jax.random.uniform(keys[1], (batch, num_items)) > 0.5
              ).astype(jnp.float32)
    bias = 0.1 * jax.random.normal(keys[2], (batch, num_items),
                                   dtype=jnp.float32)
    out1 = jax.block_until_ready(
        listnet_ranking_loss(scores, labels, bias, temperature=temperature))
    ref1 = _reference_loss(scores, labels, bias, temperature)
    assert jnp.allclose(out1, ref1, atol=1e-5, rtol=1e-5), (out1, ref1)

    # Case 2: no position bias, ragged batch (unpacked, masked last tile,
    # two "parallel" tiles).
    b2, n2 = 37, 16
    scores2 = jax.random.normal(keys[3], (b2, n2), dtype=jnp.float32)
    labels2 = (jax.random.uniform(keys[4], (b2, n2)) > 0.5).astype(jnp.float32)
    out2 = jax.block_until_ready(
        listnet_ranking_loss(scores2, labels2, None, temperature=1.0))
    ref2 = _reference_loss(scores2, labels2, None, 1.0)
    assert jnp.allclose(out2, ref2, atol=1e-5, rtol=1e-5), (out2, ref2)

    # Case 3: bf16 scores/bias DMA'd in native dtype (packed: g=16, w=128).
    b3, n3 = 32, 8
    scores3 = jax.random.normal(keys[5], (b3, n3), dtype=jnp.bfloat16)
    labels3 = (jax.random.uniform(keys[6], (b3, n3)) > 0.5).astype(jnp.float32)
    bias3 = (0.1 * jax.random.normal(keys[7], (b3, n3))).astype(jnp.bfloat16)
    out3 = jax.block_until_ready(
        listnet_ranking_loss(scores3, labels3, bias3, temperature=0.5))
    ref3 = _reference_loss(scores3, labels3, bias3, 0.5)
    assert jnp.allclose(out3, ref3, atol=1e-4, rtol=1e-4), (out3, ref3)

    print("KERNEL_OK")
</pallas_src>

<mosaic_0001>
module attributes {stable_mosaic.version = 11 : i64} {
  func.func @_listnet_kernel(%arg0: i32, %arg1: memref<1x16xf32, #tpu.memory_space<vmem>>, %arg2: memref<1x16xf32, #tpu.memory_space<vmem>>, %arg3: memref<1x16xf32, #tpu.memory_space<vmem>>, %arg4: memref<1x1xf32, #tpu.memory_space<smem>>) attributes {dimension_semantics = [#tpu.dimension_semantics<parallel>], iteration_bounds = array<i64: 1>, scalar_prefetch = 0 : i64, scratch_operands = 0 : i64, tpu.core_type = #tpu.core_type<tc>, window_params = [{transform_indices = @transform_0, window_bounds = array<i64: 1, 16>}, {transform_indices = @transform_1, window_bounds = array<i64: 1, 16>}, {transform_indices = @transform_2, window_bounds = array<i64: 1, 16>}, {transform_indices = @transform_3, window_bounds = array<i64: 1, 1>}]} {
    %c0 = arith.constant 0 : index
    %c0_0 = arith.constant 0 : index
    %0 = vector.load %arg1[%c0, %c0_0] : memref<1x16xf32, #tpu.memory_space<vmem>>, vector<1x16xf32>
    %c0_1 = arith.constant 0 : index
    %c0_2 = arith.constant 0 : index
    %1 = vector.load %arg3[%c0_1, %c0_2] : memref<1x16xf32, #tpu.memory_space<vmem>>, vector<1x16xf32>
    %2 = arith.addf %0, %1 : vector<1x16xf32>
    %cst = arith.constant 1.42857146 : f32
    %3 = vector.broadcast %cst : f32 to vector<1x16xf32>
    %4 = arith.mulf %2, %3 : vector<1x16xf32>
    %c0_3 = arith.constant 0 : index
    %c0_4 = arith.constant 0 : index
    %5 = vector.load %arg2[%c0_3, %c0_4] : memref<1x16xf32, #tpu.memory_space<vmem>>, vector<1x16xf32>
    %6 = vector.extract_strided_slice %4 {offsets = [0, 0], sizes = [1, 8], strides = [1, 1]} : vector<1x16xf32> to vector<1x8xf32>
    %cst_5 = arith.constant dense<0xFF800000> : vector<1xf32>
    %7 = vector.multi_reduction <maximumf>, %6, %cst_5 [1] : vector<1x8xf32> to vector<1xf32>
    %8 = vector.shape_cast %7 : vector<1xf32> to vector<1x1xf32>
    %9 = vector.extract_strided_slice %5 {offsets = [0, 0], sizes = [1, 8], strides = [1, 1]} : vector<1x16xf32> to vector<1x8xf32>
    %cst_6 = arith.constant dense<0.000000e+00> : vector<1xf32>
    %10 = vector.multi_reduction <add>, %9, %cst_6 [1] : vector<1x8xf32> to vector<1xf32>
    %11 = vector.shape_cast %10 : vector<1xf32> to vector<1x1xf32>
    %cst_7 = arith.constant 9.99999993E-9 : f32
    %12 = vector.broadcast %cst_7 : f32 to vector<1x1xf32>
    %13 = arith.maximumf %11, %12 : vector<1x1xf32>
    %cst_8 = arith.constant 1.000000e+00 : f32
    %14 = vector.broadcast %cst_8 : f32 to vector<1x1xf32>
    %15 = arith.divf %14, %13 : vector<1x1xf32>
    %16 = arith.mulf %11, %15 : vector<1x1xf32>
    %17 = vector.extract_strided_slice %4 {offsets = [0, 8], sizes = [1, 8], strides = [1, 1]} : vector<1x16xf32> to vector<1x8xf32>
    %cst_9 = arith.constant dense<0xFF800000> : vector<1xf32>
    %18 = vector.multi_reduction <maximumf>, %17, %cst_9 [1] : vector<1x8xf32> to vector<1xf32>
    %19 = vector.shape_cast %18 : vector<1xf32> to vector<1x1xf32>
    %20 = vector.extract_strided_slice %5 {offsets = [0, 8], sizes = [1, 8], strides = [1, 1]} : vector<1x16xf32> to vector<1x8xf32>
    %cst_10 = arith.constant dense<0.000000e+00> : vector<1xf32>
    %21 = vector.multi_reduction <add>, %20, %cst_10 [1] : vector<1x8xf32> to vector<1xf32>
    %22 = vector.shape_cast %21 : vector<1xf32> to vector<1x1xf32>
    %cst_11 = arith.constant 9.99999993E-9 : f32
    %23 = vector.broadcast %cst_11 : f32 to vector<1x1xf32>
    %24 = arith.maximumf %22, %23 : vector<1x1xf32>
    %cst_12 = arith.constant 1.000000e+00 : f32
    %25 = vector.broadcast %cst_12 : f32 to vector<1x1xf32>
    %26 = arith.divf %25, %24 : vector<1x1xf32>
    %27 = arith.mulf %22, %26 : vector<1x1xf32>
    %28 = vector.shape_cast %8 : vector<1x1xf32> to vector<1x1xf32>
    %29 = vector.broadcast %28 : vector<1x1xf32> to vector<1x8xf32>
    %30 = vector.shape_cast %19 : vector<1x1xf32> to vector<1x1xf32>
    %31 = vector.broadcast %30 : vector<1x1xf32> to vector<1x8xf32>
    %32 = tpu.concatenate %29, %31 in 1 : vector<1x8xf32>, vector<1x8xf32> -> vector<1x16xf32>
    %33 = arith.subf %4, %32 : vector<1x16xf32>
    %34 = math.exp %33 : vector<1x16xf32>
    %35 = vector.shape_cast %15 : vector<1x1xf32> to vector<1x1xf32>
    %36 = vector.broadcast %35 : vector<1x1xf32> to vector<1x8xf32>
    %37 = vector.shape_cast %26 : vector<1x1xf32> to vector<1x1xf32>
    %38 = vector.broadcast %37 : vector<1x1xf32> to vector<1x8xf32>
    %39 = tpu.concatenate %36, %38 in 1 : vector<1x8xf32>, vector<1x8xf32> -> vector<1x16xf32>
    %40 = arith.mulf %5, %39 : vector<1x16xf32>
    %41 = vector.extract_strided_slice %34 {offsets = [0, 0], sizes = [1, 8], strides = [1, 1]} : vector<1x16xf32> to vector<1x8xf32>
    %cst_13 = arith.constant dense<0.000000e+00> : vector<1xf32>
    %42 = vector.multi_reduction <add>, %41, %cst_13 [1] : vector<1x8xf32> to vector<1xf32>
    %43 = vector.shape_cast %42 : vector<1xf32> to vector<1x1xf32>
    %44 = math.log %43 : vector<1x1xf32>
    %45 = arith.mulf %44, %16 : vector<1x1xf32>
    %46 = vector.extract_strided_slice %34 {offsets = [0, 8], sizes = [1, 8], strides = [1, 1]} : vector<1x16xf32> to vector<1x8xf32>
    %cst_14 = arith.constant dense<0.000000e+00> : vector<1xf32>
    %47 = vector.multi_reduction <add>, %46, %cst_14 [1] : vector<1x8xf32> to vector<1xf32>
    %48 = vector.shape_cast %47 : vector<1xf32> to vector<1x1xf32>
    %49 = math.log %48 : vector<1x1xf32>
    %50 = arith.mulf %49, %27 : vector<1x1xf32>
    %51 = tpu.concatenate %45, %50 in 1 : vector<1x1xf32>, vector<1x1xf32> -> vector<1x2xf32>
    %cst_15 = arith.constant 0.000000e+00 : f32
    %52 = vector.broadcast %cst_15 : f32 to vector<1x16xf32>
    %53 = arith.cmpf ogt, %40, %52 : vector<1x16xf32>
    %cst_16 = arith.constant 1.000000e+00 : f32
    %54 = vector.broadcast %cst_16 : f32 to vector<1x16xf32>
    %55 = arith.select %53, %40, %54 : vector<1x16xi1>, vector<1x16xf32>
    %56 = math.log %55 : vector<1x16xf32>
    %57 = arith.subf %56, %33 : vector<1x16xf32>
    %58 = arith.mulf %40, %57 : vector<1x16xf32>
    %cst_17 = arith.constant 0.000000e+00 : f32
    %59 = vector.broadcast %cst_17 : f32 to vector<1x16xf32>
    %60 = arith.select %53, %58, %59 : vector<1x16xi1>, vector<1x16xf32>
    %61 = vector.shape_cast %60 : vector<1x16xf32> to vector<1x1x16xf32>
    %cst_18 = arith.constant dense<0.000000e+00> : vector<1xf32>
    %62 = vector.multi_reduction <add>, %61, %cst_18 [1, 2] : vector<1x1x16xf32> to vector<1xf32>
    %63 = vector.shape_cast %62 : vector<1xf32> to vector<1x1x1xf32>
    %64 = vector.extract %63[0, 0, 0] : f32 from vector<1x1x1xf32>
    %65 = vector.shape_cast %51 : vector<1x2xf32> to vector<1x1x2xf32>
    %cst_19 = arith.constant dense<0.000000e+00> : vector<1xf32>
    %66 = vector.multi_reduction <add>, %65, %cst_19 [1, 2] : vector<1x1x2xf32> to vector<1xf32>
    %67 = vector.shape_cast %66 : vector<1xf32> to vector<1x1x1xf32>
    %68 = vector.extract %67[0, 0, 0] : f32 from vector<1x1x1xf32>
    %69 = arith.addf %64, %68 : f32
    %c0_20 = arith.constant 0 : index
    %c0_21 = arith.constant 0 : index
    %70 = memref.load %arg4[%c0_20, %c0_21] : memref<1x1xf32, #tpu.memory_space<smem>>
    memref.store %69, %arg4[%c0_20, %c0_21] : memref<1x1xf32, #tpu.memory_space<smem>>
    return
  }
  func.func @transform_0(%arg0: i32) -> (i32, i32) {
    %c0_i32 = arith.constant 0 : i32
    %c0_i32_0 = arith.constant 0 : i32
    return %arg0, %c0_i32 : i32, i32
  }
  func.func @transform_1(%arg0: i32) -> (i32, i32) {
    %c0_i32 = arith.constant 0 : i32
    %c0_i32_0 = arith.constant 0 : i32
    return %arg0, %c0_i32 : i32, i32
  }
  func.func @transform_2(%arg0: i32) -> (i32, i32) {
    %c0_i32 = arith.constant 0 : i32
    %c0_i32_0 = arith.constant 0 : i32
    return %arg0, %c0_i32 : i32, i32
  }
  func.func @transform_3(%arg0: i32) -> (i32, i32) {
    %c0_i32 = arith.constant 0 : i32
    %c0_i32_0 = arith.constant 0 : i32
    return %arg0, %c0_i32 : i32, i32
  }
}

</mosaic_0001>

<llo_original>
// kernel: tpu_custom_call.1
$region0: #{tpu_custom_call.1}
  #allocation0 [shape = 'u32[]', space=smem, size = 0x4, offset = 0x4, fixed_abs, tag = 'smem constant byte address 0x4 - core index']
  #allocation1 [shape = 'u32[72,128]{1,0:T(1,128)}', space=vmem, size = 0x9000, scoped, tag = 'internal scratch']
  %s0 = inlined_call_operand.hbm [shape: f32[1,16], index: 0, kind: input, shape index: {}]
  %s1 = inlined_call_operand.hbm [shape: f32[1,16], index: 1, kind: input, shape index: {}]
  %s2 = inlined_call_operand.vmem [shape: f32[1,16], index: 2, kind: input, shape index: {}]
  %s3 = inlined_call_operand.hbm [shape: f32[1,1], index: 3, kind: output, shape index: {}]
  %s4 = sld [smem:[#allocation0]]
  $region30: #{tpu_custom_call.1} parent=0
    _
  %s6 = ssub.s32 1, %s4
  %s7 = scalar_select 0, %s6, %s4
  $region1: #{tpu_custom_call.1} parent=0
    #allocation2 [shape = 'u8[512]{0}', space=vmem, size = 0x400, scoped, tag = 'input window, operand 0, single buffered']
    #allocation3 [shape = 's32[1]{0}', space=sflag, size = 0x4, scoped, tag = 'scoped memory for tpu_custom_call.1']
    #allocation4 [shape = 's32[1]{0}', space=sflag, size = 0x4, scoped, tag = 'scoped memory for tpu_custom_call.1']
    #allocation5 [shape = 'u8[512]{0}', space=vmem, size = 0x400, scoped, tag = 'input window, operand 1, single buffered']
    #allocation6 [shape = 's32[1]{0}', space=sflag, size = 0x4, scoped, tag = 'scoped memory for tpu_custom_call.1']
    #allocation7 [shape = 'u8[512]{0}', space=smem, size = 0x200, scoped, tag = 'output window, operand 0, single buffered']
    %8 = vsyncpa [#allocation3], 0
    %9 = vsyncpa [#allocation6], 0
    %10 = vsyncpa [#allocation4], 0
    // Predicated region
    $region2: #{tpu_custom_call.1} parent=1 // pred_check
      _
    $region3: #{tpu_custom_call.1} parent=1 // pred_check_branch
      %12 = sbr.rel (0) target = $region5
    $region4: #{tpu_custom_call.1} parent=1 // pred_region
      %14 = vsyncadd [#allocation3], 0
      %s16 = sshll.u32 %s0, 4
      %s17 = int_to_ptr.hbm [resolvable:$true] %s16
      %s18 = sshll.u32 [#allocation2], 4
      %s19 = int_to_ptr.vmem [resolvable:$true] %s18
      %21 = dma.hbm_to_vmem [thread:$0]  %s17, 16, %s19, [#allocation3]
    $region5: #{tpu_custom_call.1} parent=1 // pred_fallthru
      _
    // Predicated region
    $region6: #{tpu_custom_call.1} parent=1 // pred_check
      _
    $region7: #{tpu_custom_call.1} parent=1 // pred_check_branch
      %23 = sbr.rel (0) target = $region9
    $region8: #{tpu_custom_call.1} parent=1 // pred_region
      %25 = vsyncadd [#allocation6], 0
      %s27 = sshll.u32 %s1, 4
      %s28 = int_to_ptr.hbm [resolvable:$true] %s27
      %s29 = sshll.u32 [#allocation5], 4
      %s30 = int_to_ptr.vmem [resolvable:$true] %s29
      %32 = dma.hbm_to_vmem [thread:$0]  %s28, 16, %s30, [#allocation6]
    $region9: #{tpu_custom_call.1} parent=1 // pred_fallthru
      _
    // Predicated region
    $region10: #{tpu_custom_call.1} parent=1 // pred_check
      _
    $region11: #{tpu_custom_call.1} parent=1 // pred_check_branch
      %34 = sbr.rel (0) target = $region13
    $region12: #{tpu_custom_call.1} parent=1 // pred_region
      _
    $region13: #{tpu_custom_call.1} parent=1 // pred_fallthru
      _
    // Predicated region
    $region14: #{tpu_custom_call.1} parent=1 // pred_check
      _
    $region15: #{tpu_custom_call.1} parent=1 // pred_check_branch
      %36 = sbr.rel (0) target = $region17
    $region16: #{tpu_custom_call.1} parent=1 // pred_region
      %38 = dma.done [#allocation3], 16
    $region17: #{tpu_custom_call.1} parent=1 // pred_fallthru
      _
    // Predicated region
    $region18: #{tpu_custom_call.1} parent=1 // pred_check
      _
    $region19: #{tpu_custom_call.1} parent=1 // pred_check_branch
      %40 = sbr.rel (0) target = $region21
    $region20: #{tpu_custom_call.1} parent=1 // pred_region
      %42 = dma.done [#allocation6], 16
    $region21: #{tpu_custom_call.1} parent=1 // pred_fallthru
      _
    %v43 = vld [vmem:[#allocation2] sm:$0x1]
    %v44 = vld [vmem:[%s2] sm:$0x1]
    %v45 = vadd.f32 %v43, %v44
    %v46 = vmul.f32 %v45, 1.4285715
    %v47 = vld [vmem:[#allocation5] sm:$0x1]
    %vm48 = vcmask 57344
    %v49 = vsel %vm48, %v46, -inf
    %50 = vmax.xlane.f32.xlu0 %v49
    %v51 = vpop.xlane.xlu0 %50
    %v52 = vsel %vm48, %v47, 0.0
    %53 = vadd.xlane.f32.xlu0 %v52
    %v54 = vpop.xlane.xlu0 %53
    %v55 = vmax.f32 %v54, 1e-08
    %v56 = vrcp.pop %v55
    %v57 = vmul.f32 %v55, %v56
    %v58 = vsub.f32 1.0, %v57
    %v59 = vmul.f32 %v56, %v58
    %v60 = vadd.f32 %v56, %v59
    %vm61 = vweird.f32 %v55
    %vm62 = vweird.f32 %v56
    %vm63 = vmor %vm61, %vm62
    %v64 = vsel %vm63, %v56, %v60
    %v65 = vand.u32 2147483647, %v55
    %vm66 = vcmp.eq.f32.partialorder %v65, 8.507059e+37
    %v67 = vand.u32 %v55, 2147483648
    %v68 = vor.u32 1.1754944e-38, %v67
    %v69 = vsel %vm66, %v68, %v64
    %v70 = vmul.f32 1.0, %v69
    %v71 = vmul.f32 %v54, %v70
    %vm72 = vcmask 122944
    %v73 = vsel %vm72, %v46, -inf
    %74 = vmax.xlane.f32.xlu0 %v73
    %v75 = vpop.xlane.xlu0 %74
    %v77 = vperm.slane %v47, 0
    %78 = vrot.lane.b32.xlu0 %v77, 120
    %v79 = vpop.permute.xlu0 %78
    %v81 = vsel %vm48, %v79, 0.0
    %82 = vadd.xlane.f32.xlu0 %v81
    %v83 = vpop.xlane.xlu0 %82
    %v84 = vmax.f32 %v83, 1e-08
    %v85 = vrcp.pop %v84
    %v86 = vmul.f32 %v84, %v85
    %v87 = vsub.f32 1.0, %v86
    %v88 = vmul.f32 %v85, %v87
    %v89 = vadd.f32 %v85, %v88
    %vm90 = vweird.f32 %v84
    %vm91 = vweird.f32 %v85
    %vm92 = vmor %vm90, %vm91
    %v93 = vsel %vm92, %v85, %v89
    %v94 = vand.u32 2147483647, %v84
    %vm95 = vcmp.eq.f32.partialorder %v94, 8.507059e+37
    %v96 = vand.u32 %v84, 2147483648
    %v97 = vor.u32 1.1754944e-38, %v96
    %v98 = vsel %vm95, %v97, %v93
    %v99 = vmul.f32 1.0, %v98
    %v100 = vmul.f32 %v83, %v99
    %vm101 = vcmask 64512
    %v102 = vsel %vm101, %v51, %v75
    %v103 = vsub.f32 %v46, %v102
    %v104 = vmul.f32 %v103, 1.442695
    %v105 = vpow.pop %v104
    %v106 = vsel %vm101, %v70, %v99
    %v107 = vmul.f32 %v47, %v106
    %v108 = vsel %vm48, %v105, 0.0
    %109 = vadd.xlane.f32.xlu0 %v108
    %v110 = vpop.xlane.xlu0 %109
    %v111 = vlog2.pop %v110
    %v112 = vmul.f32 %v111, 0.6931472
    %v113 = vmul.f32 %v112, %v71
    %v115 = vperm.slane %v105, 0
    %116 = vrot.lane.b32.xlu0 %v115, 120
    %v117 = vpop.permute.xlu0 %116
    %v119 = vsel %vm48, %v117, 0.0
    %120 = vadd.xlane.f32.xlu0 %v119
    %v121 = vpop.xlane.xlu0 %120
    %v122 = vlog2.pop %v121
    %v123 = vmul.f32 %v122, 0.6931472
    %v124 = vmul.f32 %v123, %v100
    %vm125 = vcmask 7168
    %v126 = vsel %vm125, %v113, %v124
    %vm127 = vcmp.gt.f32.partialorder %v107, 0.0
    %v128 = vsel %vm127, %v107, 1.0
    %v129 = vlog2.pop %v128
    %v130 = vmul.f32 %v129, 0.6931472
    %v131 = vsub.f32 %v130, %v103
    %v132 = vmul.f32 %v107, %v131
    %v133 = vsel %vm127, %v132, 0.0
    %vm134 = vcmask 122880
    %v135 = vsel %vm134, %v133, 0.0
    %136 = vadd.xlane.f32.xlu0 %v135
    %v137 = vpop.xlane.xlu0 %136
    %v138 = vrot.slane %v137, 4
    %v139 = vadd.f32 %v137, %v138
    %v140 = vrot.slane %v139, 2
    %v141 = vadd.f32 %v139, %v140
    %v142 = vrot.slane %v141, 1
    %v143 = vadd.f32 %v141, %v142
    %s144 = vtos %v143
    %vm145 = vcmask 8192
    %v146 = vsel %vm145, %v126, 0.0
    %147 = vadd.xlane.f32.xlu0 %v146
    %v148 = vpop.xlane.xlu0 %147
    %v149 = vrot.slane %v148, 4
    %v150 = vadd.f32 %v148, %v149
    %v151 = vrot.slane %v150, 2
    %v152 = vadd.f32 %v150, %v151
    %v153 = vrot.slane %v152, 1
    %v154 = vadd.f32 %v152, %v153
    %s155 = vtos %v154
    %s156 = sadd.f32 %s144, %s155
    %s157 = scalar_lea.smem [#allocation7], 0
    %158 = sst [smem:[%s157]] %s156
    // Predicated region
    $region22: #{tpu_custom_call.1} parent=1 // pred_check
      _
    $region23: #{tpu_custom_call.1} parent=1 // pred_check_branch
      %160 = sbr.rel (0) target = $region25
    $region24: #{tpu_custom_call.1} parent=1 // pred_region
      %162 = vsyncadd [#allocation4], 0
      %s164 = sshll.u32 %s3, 4
      %s165 = int_to_ptr.hbm [resolvable:$true] %s164
      %167 = dma.smem_to_hbm [#allocation7], 16, %s165, [#allocation4]
    $region25: #{tpu_custom_call.1} parent=1 // pred_fallthru
      _
    // Predicated region
    $region26: #{tpu_custom_call.1} parent=1 // pred_check
      _
    $region27: #{tpu_custom_call.1} parent=1 // pred_check_branch
      %169 = sbr.rel (0) target = $region29
    $region28: #{tpu_custom_call.1} parent=1 // pred_region
      %171 = dma.done [#allocation4], 16
    $region29: #{tpu_custom_call.1} parent=1 // pred_fallthru
      _
    %172 = sfence
    %173 = vsyncpa [#allocation3], 1
    %174 = vsyncpa [#allocation6], 1
    %175 = vsyncpa [#allocation4], 1

</llo_original>
